<compile_context>
chip_gen: v7x
topology: tpu7x:2x2x1
jax: 0.10.0
libtpu: 0.0.40
codegen_flags: <defaults>
</compile_context>

<pallas_src>
import functools

import jax
import jax.numpy as jnp
from jax.experimental import pallas as pl
from jax.experimental.pallas import tpu as pltpu

# ---- model hyperparameters (from the PyTorch module) -----------------------
N_EMBD = 32
NUM_HEADS = 4
HEAD_SIZE = N_EMBD // NUM_HEADS  # 8  (head_size * num_heads == n_embd)
BLOCK_SIZE = 10                  # max T (causal mask size in the module)


def mha_kernel(x_ref, w_ref, b_ref, m_ref, o_ref, *, H, hs, C):
    """Whole problem in one invocation.

    x_ref : (BT, C)               VMEM  flattened tokens (BT = B*T)
    w_ref : (C, H*C + 2*H*hs)     VMEM  fused [Wv@Wp | Wq*scale | Wk] weights
    b_ref : (1, C)                VMEM  output-projection bias
    m_ref : (BT, BT)              VMEM  additive mask (0 valid / -1e30 masked), f32
    o_ref : (BT, C)               VMEM
    """
    BT = x_ref.shape[0]
    x = x_ref[...].astype(jnp.float32)                        # (BT, C)
    w = w_ref[...].astype(jnp.float32)                        # (C, H*C + 2*H*hs)
    mask = m_ref[...]                                         # (BT, BT) f32, stays f32
                                                              # (-1e30 would overflow in bf16)

    # One fused MXU projection for q, k, and the value-already-projected-to-C path.
    fused = jnp.dot(x, w, preferred_element_type=jnp.float32)  # (BT, H*C + 2*H*hs)
    q_off = H * C            # vp occupies lanes [0, 128): exactly one lane tile
    k_off = H * C + H * hs

    out = jnp.zeros((BT, C), jnp.float32)
    for h in range(H):
        q_h = fused[:, q_off + h * hs: q_off + (h + 1) * hs]   # (BT, hs), scale folded in
        k_h = fused[:, k_off + h * hs: k_off + (h + 1) * hs]   # (BT, hs)
        # q @ k^T without materializing a transpose (contract feature axes).
        s = jax.lax.dot_general(q_h, k_h, (((1,), (1,)), ((), ())),
                                preferred_element_type=jnp.float32)  # (BT, BT)
        s = s + mask                                           # causal + same-batch
        m = jnp.max(s, axis=-1, keepdims=True)
        e = jnp.exp(s - m)
        attn = e / jnp.sum(e, axis=-1, keepdims=True)          # exact division (f32)
        # attn @ (x @ Wv[h] @ Wp_h): output projection folded in, accumulate per head.
        vp_h = fused[:, h * C:(h + 1) * C]                     # (BT, C), tile-aligned segment
        out = out + jnp.dot(attn, vp_h, preferred_element_type=jnp.float32)

    o_ref[...] = (out + b_ref[...].astype(jnp.float32)).astype(o_ref.dtype)


def fuse_params(wk, wq, wv, wp):
    """One-time (parameter-load time) weight fusion.

    wk/wq/wv: (H, C, hs); wp: (H*hs, C).  Returns (C, H*C + 2*H*hs) fused weight
    laid out as [Wv@Wp | Wq*scale | Wk] so the 128-wide Wv@Wp block is lane-tile
    aligned at offset 0.
    """
    H, C, hs = wq.shape
    hp = jax.lax.Precision.HIGHEST
    scale = jnp.float32(1.0 / (hs ** 0.5))
    wq_f = jnp.transpose(wq, (1, 0, 2)).reshape(C, H * hs) * scale   # scale folded into Wq
    wk_f = jnp.transpose(wk, (1, 0, 2)).reshape(C, H * hs)
    # Fold value proj with output proj: wvp[h] = wv[h] @ wp[h*hs:(h+1)*hs, :].
    wp_heads = wp.reshape(H, hs, C)
    wvp = jnp.einsum('hcd,hde->hce', wv, wp_heads, precision=hp)     # (H, C, C)
    wvp_f = jnp.transpose(wvp, (1, 0, 2)).reshape(C, H * C)
    return jnp.concatenate([wvp_f, wq_f, wk_f], axis=1).astype(jnp.float32)


def make_causal_block_mask(B, T):
    """One-time (B,T)-dependent additive mask: 0 where (same batch & causal), else -1e30."""
    BT = B * T
    r = jnp.arange(BT)
    same_batch = (r[:, None] // T) == (r[None, :] // T)
    causal = (r[:, None] % T) >= (r[None, :] % T)
    return jnp.where(same_batch & causal, 0.0, -1e30).astype(jnp.float32)


def multi_head_attention(x, w_fused, bp, mask, num_heads):
    """Hot path.  x: (B, T, C); w_fused: (C, H*C + 2*H*hs); bp: (1, C); mask: (B*T, B*T)."""
    B, T, C = x.shape
    H = num_heads
    hs = (w_fused.shape[1] - H * C) // (2 * H)
    BT = B * T
    w_cols = w_fused.shape[1]

    kernel = functools.partial(mha_kernel, H=H, hs=hs, C=C)
    out2d = pl.pallas_call(
        kernel,
        out_shape=jax.ShapeDtypeStruct((BT, C), x.dtype),
        grid_spec=pltpu.PrefetchScalarGridSpec(
            num_scalar_prefetch=0,
            grid=(1,),                                         # single invocation
            in_specs=[
                pl.BlockSpec((BT, C), lambda i: (0, 0)),       # x (flattened tokens)
                pl.BlockSpec((C, w_cols), lambda i: (0, 0)),   # fused weights
                pl.BlockSpec((1, C), lambda i: (0, 0)),        # bias
                pl.BlockSpec((BT, BT), lambda i: (0, 0)),      # precomputed additive mask
            ],
            out_specs=pl.BlockSpec((BT, C), lambda i: (0, 0)),
        ),
        compiler_params=pltpu.CompilerParams(
            # 1-step grid: don't megacore-shard (v7x).  Switch the token dim to a
            # 'parallel' grid axis only once BT is large enough to amortize it.
            dimension_semantics=("arbitrary",)),
    )(x.reshape(BT, C), w_fused, bp, mask)
    return out2d.reshape(B, T, C)


def reference(x, wk, wq, wv, wp, bp):
    """Pure-JAX reference of the PyTorch forward (eval mode), HIGHEST matmul precision."""
    hp = jax.lax.Precision.HIGHEST
    B, T, C = x.shape
    H, _, hs = wq.shape
    xf = x.astype(jnp.float32)
    tril = jnp.tril(jnp.ones((T, T), jnp.float32))
    outs = []
    for h in range(H):
        k = jnp.einsum('btc,cd->btd', xf, wk[h], precision=hp)
        q = jnp.einsum('btc,cd->btd', xf, wq[h], precision=hp)
        v = jnp.einsum('btc,cd->btd', xf, wv[h], precision=hp)
        wei = jnp.einsum('bqd,bkd->bqk', q, k, precision=hp) * (hs ** -0.5)
        wei = jnp.where(tril == 0, -jnp.inf, wei)
        wei = jax.nn.softmax(wei, axis=-1)
        outs.append(jnp.einsum('bqk,bkd->bqd', wei, v, precision=hp))
    cat = jnp.concatenate(outs, axis=-1)
    return jnp.einsum('btd,dc->btc', cat, wp, precision=hp) + bp


if __name__ == "__main__":
    key = jax.random.PRNGKey(0)
    B, T = 2, 8   # T <= block_size (10)

    k_x, k_wk, k_wq, k_wv, k_wp, k_bp = jax.random.split(key, 6)
    x = jax.random.normal(k_x, (B, T, N_EMBD), dtype=jnp.float32)

    # deterministic parameter init (synthetic, not a checkpoint)
    init = lambda k, s: (jax.random.normal(k, s, dtype=jnp.float32)
                         * (1.0 / jnp.sqrt(jnp.float32(s[-2] if len(s) > 1 else s[-1]))))
    wk = init(k_wk, (NUM_HEADS, N_EMBD, HEAD_SIZE))
    wq = init(k_wq, (NUM_HEADS, N_EMBD, HEAD_SIZE))
    wv = init(k_wv, (NUM_HEADS, N_EMBD, HEAD_SIZE))
    wp = init(k_wp, (NUM_HEADS * HEAD_SIZE, N_EMBD))
    bp = jax.random.normal(k_bp, (1, N_EMBD), dtype=jnp.float32) * 0.01

    # One-time prep (parameter-load time): fused weights + (B,T) mask.
    w_fused = jax.block_until_ready(fuse_params(wk, wq, wv, wp))
    mask = jax.block_until_ready(make_causal_block_mask(B, T))

    out = multi_head_attention(x, w_fused, bp, mask, NUM_HEADS)
    out = jax.block_until_ready(out)

    ref = reference(x, wk, wq, wv, wp, bp)
    assert out.shape == (B, T, N_EMBD)
    # Tolerance rationale: the kernel is algebraically identical to the reference
    # (only f32 re-association from the Wq-scale / Wv@Wp folds, ~1e-6 rel).  The
    # margin covers the backend's *default* MXU matmul precision for f32 operands
    # (possible bf16 passes) vs. the HIGHEST-precision reference; a genuine logic
    # bug would produce O(0.1-1) deviations, far above this bound.
    assert jnp.allclose(out, ref, atol=2e-2, rtol=2e-2), "mismatch vs reference"

    print("KERNEL_OK")
</pallas_src>

<mosaic_0001>
module attributes {stable_mosaic.version = 11 : i64} {
  func.func @mha_kernel(%arg0: i32, %arg1: memref<16x32xf32, #tpu.memory_space<vmem>>, %arg2: memref<32x192xf32, #tpu.memory_space<vmem>>, %arg3: memref<1x32xf32, #tpu.memory_space<vmem>>, %arg4: memref<16x16xf32, #tpu.memory_space<vmem>>, %arg5: memref<16x32xf32, #tpu.memory_space<vmem>>) attributes {dimension_semantics = [#tpu.dimension_semantics<arbitrary>], iteration_bounds = array<i64: 1>, scalar_prefetch = 0 : i64, scratch_operands = 0 : i64, tpu.core_type = #tpu.core_type<tc>, window_params = [{pipeline_mode = #tpu.pipeline_mode<synchronous>, transform_indices = @transform_0, window_bounds = array<i64: 16, 32>}, {pipeline_mode = #tpu.pipeline_mode<synchronous>, transform_indices = @transform_1, window_bounds = array<i64: 32, 192>}, {pipeline_mode = #tpu.pipeline_mode<synchronous>, transform_indices = @transform_2, window_bounds = array<i64: 1, 32>}, {pipeline_mode = #tpu.pipeline_mode<synchronous>, transform_indices = @transform_3, window_bounds = array<i64: 16, 16>}, {pipeline_mode = #tpu.pipeline_mode<synchronous>, transform_indices = @transform_4, window_bounds = array<i64: 16, 32>}]} {
    %c0 = arith.constant 0 : index
    %c0_0 = arith.constant 0 : index
    %0 = vector.load %arg1[%c0, %c0_0] : memref<16x32xf32, #tpu.memory_space<vmem>>, vector<16x32xf32>
    %c0_1 = arith.constant 0 : index
    %c0_2 = arith.constant 0 : index
    %1 = vector.load %arg2[%c0_1, %c0_2] : memref<32x192xf32, #tpu.memory_space<vmem>>, vector<32x192xf32>
    %c0_3 = arith.constant 0 : index
    %c0_4 = arith.constant 0 : index
    %2 = vector.load %arg4[%c0_3, %c0_4] : memref<16x16xf32, #tpu.memory_space<vmem>>, vector<16x16xf32>
    %cst = arith.constant dense<0.000000e+00> : vector<16x192xf32>
    %3 = tpu.matmul %0, %1, %cst {dimension_numbers = #tpu.dot_dimension_numbers<[1], [0], [0], [1], [0, 0, 1, 1], [], []>} : vector<16x32xf32>, vector<32x192xf32>, vector<16x192xf32> -> vector<16x192xf32>
    %cst_5 = arith.constant 0.000000e+00 : f32
    %4 = vector.broadcast %cst_5 : f32 to vector<16x32xf32>
    %5 = vector.extract_strided_slice %3 {offsets = [0, 128], sizes = [16, 8], strides = [1, 1]} : vector<16x192xf32> to vector<16x8xf32>
    %6 = vector.extract_strided_slice %3 {offsets = [0, 160], sizes = [16, 8], strides = [1, 1]} : vector<16x192xf32> to vector<16x8xf32>
    %cst_6 = arith.constant dense<0.000000e+00> : vector<16x16xf32>
    %7 = tpu.matmul %5, %6, %cst_6 {dimension_numbers = #tpu.dot_dimension_numbers<[1], [1], [0], [0], [0, 0, 1, 0], [], []>} : vector<16x8xf32>, vector<16x8xf32>, vector<16x16xf32> -> vector<16x16xf32>
    %8 = arith.addf %7, %2 : vector<16x16xf32>
    %cst_7 = arith.constant dense<0xFF800000> : vector<16xf32>
    %9 = vector.multi_reduction <maximumf>, %8, %cst_7 [1] : vector<16x16xf32> to vector<16xf32>
    %10 = vector.shape_cast %9 : vector<16xf32> to vector<16x1xf32>
    %11 = vector.broadcast %10 : vector<16x1xf32> to vector<16x16xf32>
    %12 = arith.subf %8, %11 : vector<16x16xf32>
    %13 = math.exp %12 : vector<16x16xf32>
    %cst_8 = arith.constant dense<0.000000e+00> : vector<16xf32>
    %14 = vector.multi_reduction <add>, %13, %cst_8 [1] : vector<16x16xf32> to vector<16xf32>
    %15 = vector.shape_cast %14 : vector<16xf32> to vector<16x1xf32>
    %16 = vector.broadcast %15 : vector<16x1xf32> to vector<16x16xf32>
    %17 = arith.divf %13, %16 : vector<16x16xf32>
    %18 = vector.extract_strided_slice %3 {offsets = [0, 0], sizes = [16, 32], strides = [1, 1]} : vector<16x192xf32> to vector<16x32xf32>
    %cst_9 = arith.constant dense<0.000000e+00> : vector<16x32xf32>
    %19 = tpu.matmul %17, %18, %cst_9 {dimension_numbers = #tpu.dot_dimension_numbers<[1], [0], [0], [1], [0, 0, 1, 1], [], []>} : vector<16x16xf32>, vector<16x32xf32>, vector<16x32xf32> -> vector<16x32xf32>
    %20 = arith.addf %4, %19 : vector<16x32xf32>
    %21 = vector.extract_strided_slice %3 {offsets = [0, 136], sizes = [16, 8], strides = [1, 1]} : vector<16x192xf32> to vector<16x8xf32>
    %22 = vector.extract_strided_slice %3 {offsets = [0, 168], sizes = [16, 8], strides = [1, 1]} : vector<16x192xf32> to vector<16x8xf32>
    %cst_10 = arith.constant dense<0.000000e+00> : vector<16x16xf32>
    %23 = tpu.matmul %21, %22, %cst_10 {dimension_numbers = #tpu.dot_dimension_numbers<[1], [1], [0], [0], [0, 0, 1, 0], [], []>} : vector<16x8xf32>, vector<16x8xf32>, vector<16x16xf32> -> vector<16x16xf32>
    %24 = arith.addf %23, %2 : vector<16x16xf32>
    %cst_11 = arith.constant dense<0xFF800000> : vector<16xf32>
    %25 = vector.multi_reduction <maximumf>, %24, %cst_11 [1] : vector<16x16xf32> to vector<16xf32>
    %26 = vector.shape_cast %25 : vector<16xf32> to vector<16x1xf32>
    %27 = vector.broadcast %26 : vector<16x1xf32> to vector<16x16xf32>
    %28 = arith.subf %24, %27 : vector<16x16xf32>
    %29 = math.exp %28 : vector<16x16xf32>
    %cst_12 = arith.constant dense<0.000000e+00> : vector<16xf32>
    %30 = vector.multi_reduction <add>, %29, %cst_12 [1] : vector<16x16xf32> to vector<16xf32>
    %31 = vector.shape_cast %30 : vector<16xf32> to vector<16x1xf32>
    %32 = vector.broadcast %31 : vector<16x1xf32> to vector<16x16xf32>
    %33 = arith.divf %29, %32 : vector<16x16xf32>
    %34 = vector.extract_strided_slice %3 {offsets = [0, 32], sizes = [16, 32], strides = [1, 1]} : vector<16x192xf32> to vector<16x32xf32>
    %cst_13 = arith.constant dense<0.000000e+00> : vector<16x32xf32>
    %35 = tpu.matmul %33, %34, %cst_13 {dimension_numbers = #tpu.dot_dimension_numbers<[1], [0], [0], [1], [0, 0, 1, 1], [], []>} : vector<16x16xf32>, vector<16x32xf32>, vector<16x32xf32> -> vector<16x32xf32>
    %36 = arith.addf %20, %35 : vector<16x32xf32>
    %37 = vector.extract_strided_slice %3 {offsets = [0, 144], sizes = [16, 8], strides = [1, 1]} : vector<16x192xf32> to vector<16x8xf32>
    %38 = vector.extract_strided_slice %3 {offsets = [0, 176], sizes = [16, 8], strides = [1, 1]} : vector<16x192xf32> to vector<16x8xf32>
    %cst_14 = arith.constant dense<0.000000e+00> : vector<16x16xf32>
    %39 = tpu.matmul %37, %38, %cst_14 {dimension_numbers = #tpu.dot_dimension_numbers<[1], [1], [0], [0], [0, 0, 1, 0], [], []>} : vector<16x8xf32>, vector<16x8xf32>, vector<16x16xf32> -> vector<16x16xf32>
    %40 = arith.addf %39, %2 : vector<16x16xf32>
    %cst_15 = arith.constant dense<0xFF800000> : vector<16xf32>
    %41 = vector.multi_reduction <maximumf>, %40, %cst_15 [1] : vector<16x16xf32> to vector<16xf32>
    %42 = vector.shape_cast %41 : vector<16xf32> to vector<16x1xf32>
    %43 = vector.broadcast %42 : vector<16x1xf32> to vector<16x16xf32>
    %44 = arith.subf %40, %43 : vector<16x16xf32>
    %45 = math.exp %44 : vector<16x16xf32>
    %cst_16 = arith.constant dense<0.000000e+00> : vector<16xf32>
    %46 = vector.multi_reduction <add>, %45, %cst_16 [1] : vector<16x16xf32> to vector<16xf32>
    %47 = vector.shape_cast %46 : vector<16xf32> to vector<16x1xf32>
    %48 = vector.broadcast %47 : vector<16x1xf32> to vector<16x16xf32>
    %49 = arith.divf %45, %48 : vector<16x16xf32>
    %50 = vector.extract_strided_slice %3 {offsets = [0, 64], sizes = [16, 32], strides = [1, 1]} : vector<16x192xf32> to vector<16x32xf32>
    %cst_17 = arith.constant dense<0.000000e+00> : vector<16x32xf32>
    %51 = tpu.matmul %49, %50, %cst_17 {dimension_numbers = #tpu.dot_dimension_numbers<[1], [0], [0], [1], [0, 0, 1, 1], [], []>} : vector<16x16xf32>, vector<16x32xf32>, vector<16x32xf32> -> vector<16x32xf32>
    %52 = arith.addf %36, %51 : vector<16x32xf32>
    %53 = vector.extract_strided_slice %3 {offsets = [0, 152], sizes = [16, 8], strides = [1, 1]} : vector<16x192xf32> to vector<16x8xf32>
    %54 = vector.extract_strided_slice %3 {offsets = [0, 184], sizes = [16, 8], strides = [1, 1]} : vector<16x192xf32> to vector<16x8xf32>
    %cst_18 = arith.constant dense<0.000000e+00> : vector<16x16xf32>
    %55 = tpu.matmul %53, %54, %cst_18 {dimension_numbers = #tpu.dot_dimension_numbers<[1], [1], [0], [0], [0, 0, 1, 0], [], []>} : vector<16x8xf32>, vector<16x8xf32>, vector<16x16xf32> -> vector<16x16xf32>
    %56 = arith.addf %55, %2 : vector<16x16xf32>
    %cst_19 = arith.constant dense<0xFF800000> : vector<16xf32>
    %57 = vector.multi_reduction <maximumf>, %56, %cst_19 [1] : vector<16x16xf32> to vector<16xf32>
    %58 = vector.shape_cast %57 : vector<16xf32> to vector<16x1xf32>
    %59 = vector.broadcast %58 : vector<16x1xf32> to vector<16x16xf32>
    %60 = arith.subf %56, %59 : vector<16x16xf32>
    %61 = math.exp %60 : vector<16x16xf32>
    %cst_20 = arith.constant dense<0.000000e+00> : vector<16xf32>
    %62 = vector.multi_reduction <add>, %61, %cst_20 [1] : vector<16x16xf32> to vector<16xf32>
    %63 = vector.shape_cast %62 : vector<16xf32> to vector<16x1xf32>
    %64 = vector.broadcast %63 : vector<16x1xf32> to vector<16x16xf32>
    %65 = arith.divf %61, %64 : vector<16x16xf32>
    %66 = vector.extract_strided_slice %3 {offsets = [0, 96], sizes = [16, 32], strides = [1, 1]} : vector<16x192xf32> to vector<16x32xf32>
    %cst_21 = arith.constant dense<0.000000e+00> : vector<16x32xf32>
    %67 = tpu.matmul %65, %66, %cst_21 {dimension_numbers = #tpu.dot_dimension_numbers<[1], [0], [0], [1], [0, 0, 1, 1], [], []>} : vector<16x16xf32>, vector<16x32xf32>, vector<16x32xf32> -> vector<16x32xf32>
    %68 = arith.addf %52, %67 : vector<16x32xf32>
    %c0_22 = arith.constant 0 : index
    %c0_23 = arith.constant 0 : index
    %69 = vector.load %arg3[%c0_22, %c0_23] : memref<1x32xf32, #tpu.memory_space<vmem>>, vector<1x32xf32>
    %70 = vector.broadcast %69 : vector<1x32xf32> to vector<16x32xf32>
    %71 = arith.addf %68, %70 : vector<16x32xf32>
    %c0_24 = arith.constant 0 : index
    %c0_25 = arith.constant 0 : index
    %72 = vector.load %arg5[%c0_24, %c0_25] : memref<16x32xf32, #tpu.memory_space<vmem>>, vector<16x32xf32>
    tpu.vector_store %arg5[%c0_24, %c0_25], %71 {strides = array<i32>} : memref<16x32xf32, #tpu.memory_space<vmem>>, vector<16x32xf32>,
    return
  }
  func.func @transform_0(%arg0: i32) -> (i32, i32) {
    %c0_i32 = arith.constant 0 : i32
    %c0_i32_0 = arith.constant 0 : i32
    %c0_i32_1 = arith.constant 0 : i32
    return %c0_i32, %c0_i32_0 : i32, i32
  }
  func.func @transform_1(%arg0: i32) -> (i32, i32) {
    %c0_i32 = arith.constant 0 : i32
    %c0_i32_0 = arith.constant 0 : i32
    %c0_i32_1 = arith.constant 0 : i32
    return %c0_i32, %c0_i32_0 : i32, i32
  }
  func.func @transform_2(%arg0: i32) -> (i32, i32) {
    %c0_i32 = arith.constant 0 : i32
    %c0_i32_0 = arith.constant 0 : i32
    %c0_i32_1 = arith.constant 0 : i32
    return %c0_i32, %c0_i32_0 : i32, i32
  }
  func.func @transform_3(%arg0: i32) -> (i32, i32) {
    %c0_i32 = arith.constant 0 : i32
    %c0_i32_0 = arith.constant 0 : i32
    %c0_i32_1 = arith.constant 0 : i32
    return %c0_i32, %c0_i32_0 : i32, i32
  }
  func.func @transform_4(%arg0: i32) -> (i32, i32) {
    %c0_i32 = arith.constant 0 : i32
    %c0_i32_0 = arith.constant 0 : i32
    %c0_i32_1 = arith.constant 0 : i32
    return %c0_i32, %c0_i32_0 : i32, i32
  }
}

</mosaic_0001>

<llo_original>
// kernel: tpu_custom_call.1
$region0: #{tpu_custom_call.1}
  #allocation0 [shape = 'u32[]', space=smem, size = 0x4, offset = 0x4, fixed_abs, tag = 'smem constant byte address 0x4 - core index']
  #allocation1 [shape = 'u32[144,128]{1,0:T(1,128)}', space=vmem, size = 0x12000, scoped, tag = 'internal scratch']
  %s0 = inlined_call_operand.hbm [shape: f32[16,32], index: 0, kind: input, shape index: {}]
  %s1 = inlined_call_operand.hbm [shape: f32[32,192], index: 1, kind: input, shape index: {}]
  %s2 = inlined_call_operand.vmem [shape: f32[1,32], index: 2, kind: input, shape index: {}]
  %s3 = inlined_call_operand.hbm [shape: f32[16,16], index: 3, kind: input, shape index: {}]
  %s4 = inlined_call_operand.hbm [shape: f32[16,32], index: 4, kind: output, shape index: {}]
  %s5 = sld [smem:[#allocation0]]
  $region38: #{tpu_custom_call.1} parent=0
    _
  %s7 = ssub.s32 1, %s5
  %s8 = scalar_select 0, %s7, %s5
  $region1: #{tpu_custom_call.1} parent=0
    #allocation2 [shape = 'u8[8192]{0}', space=vmem, size = 0x2000, scoped, tag = 'input window, operand 0, single buffered']
    #allocation3 [shape = 's32[1]{0}', space=sflag, size = 0x4, scoped, tag = 'scoped memory for tpu_custom_call.1']
    #allocation4 [shape = 's32[1]{0}', space=sflag, size = 0x4, scoped, tag = 'scoped memory for tpu_custom_call.1']
    #allocation5 [shape = 'u8[32768]{0}', space=vmem, size = 0x8000, scoped, tag = 'input window, operand 1, single buffered']
    #allocation6 [shape = 's32[1]{0}', space=sflag, size = 0x4, scoped, tag = 'scoped memory for tpu_custom_call.1']
    #allocation7 [shape = 'u8[8192]{0}', space=vmem, size = 0x2000, scoped, tag = 'input window, operand 3, single buffered']
    #allocation8 [shape = 'u8[8192]{0}', space=vmem, size = 0x2000, scoped, tag = 'output window, operand 0, single buffered']
    %9 = vsyncpa [#allocation3], 0
    %10 = vsyncpa [#allocation6], 0
    %11 = vsyncpa [#allocation4], 0
    // Predicated region
    $region2: #{tpu_custom_call.1} parent=1 // pred_check
      _
    $region3: #{tpu_custom_call.1} parent=1 // pred_check_branch
      %13 = sbr.rel (0) target = $region5
    $region4: #{tpu_custom_call.1} parent=1 // pred_region
      %s15 = ssub.s32 256, 256
      %16 = vsyncadd [#allocation3], %s15
      %s17 = sshll.u32 [#allocation2], 4
      %s18 = int_to_ptr.vmem [resolvable:$true] %s17
      %23 = dma.hbm_to_vmem [thread:$0]  %s0, 256, %s18, [#allocation3], 128, 128, 8
    $region5: #{tpu_custom_call.1} parent=1 // pred_fallthru
      _
    // Predicated region
    $region6: #{tpu_custom_call.1} parent=1 // pred_check
      _
    $region7: #{tpu_custom_call.1} parent=1 // pred_check_branch
      %25 = sbr.rel (0) target = $region9
    $region8: #{tpu_custom_call.1} parent=1 // pred_region
      %s27 = ssub.s32 1024, 1024
      %28 = vsyncadd [#allocation6], %s27
      %s29 = sshll.u32 [#allocation5], 4
      %s30 = int_to_ptr.vmem [resolvable:$true] %s29
      %35 = dma.hbm_to_vmem [thread:$0]  %s1, 1024, %s30, [#allocation6], 256, 256, 16
    $region9: #{tpu_custom_call.1} parent=1 // pred_fallthru
      _
    // Predicated region
    $region10: #{tpu_custom_call.1} parent=1 // pred_check
      _
    $region11: #{tpu_custom_call.1} parent=1 // pred_check_branch
      %37 = sbr.rel (0) target = $region13
    $region12: #{tpu_custom_call.1} parent=1 // pred_region
      _
    $region13: #{tpu_custom_call.1} parent=1 // pred_fallthru
      _
    // Predicated region
    $region14: #{tpu_custom_call.1} parent=1 // pred_check
      _
    $region15: #{tpu_custom_call.1} parent=1 // pred_check_branch
      %39 = sbr.rel (0) target = $region17
    $region16: #{tpu_custom_call.1} parent=1 // pred_region
      %s41 = ssub.s32 256, 256
      %42 = vsyncadd [#allocation6], %s41
      %s43 = sshll.u32 [#allocation7], 4
      %s44 = int_to_ptr.vmem [resolvable:$true] %s43
      %49 = dma.hbm_to_vmem [thread:$0]  %s3, 256, %s44, [#allocation6], 128, 128, 8
    $region17: #{tpu_custom_call.1} parent=1 // pred_fallthru
      _
    // Predicated region
    $region18: #{tpu_custom_call.1} parent=1 // pred_check
      _
    $region19: #{tpu_custom_call.1} parent=1 // pred_check_branch
      %51 = sbr.rel (0) target = $region21
    $region20: #{tpu_custom_call.1} parent=1 // pred_region
      %52 = dma.done [#allocation3], 256
    $region21: #{tpu_custom_call.1} parent=1 // pred_fallthru
      _
    // Predicated region
    $region22: #{tpu_custom_call.1} parent=1 // pred_check
      _
    $region23: #{tpu_custom_call.1} parent=1 // pred_check_branch
      %54 = sbr.rel (0) target = $region25
    $region24: #{tpu_custom_call.1} parent=1 // pred_region
      %55 = dma.done [#allocation6], 1024
    $region25: #{tpu_custom_call.1} parent=1 // pred_fallthru
      _
    // Predicated region
    $region26: #{tpu_custom_call.1} parent=1 // pred_check
      _
    $region27: #{tpu_custom_call.1} parent=1 // pred_check_branch
      %57 = sbr.rel (0) target = $region29
    $region28: #{tpu_custom_call.1} parent=1 // pred_region
      %58 = dma.done [#allocation6], 256
    $region29: #{tpu_custom_call.1} parent=1 // pred_fallthru
      _
    %v59 = vld [vmem:[#allocation2] sm:$0xff]
    %v60 = vld [vmem:[#allocation2 + $0x8] sm:$0xff]
    %v61 = vld [vmem:[#allocation5] sm:$0xff]
    %v62 = vld [vmem:[#allocation5 + $0x8] sm:$0xff]
    %v63 = vld [vmem:[#allocation5 + $0x10] sm:$0xff]
    %v64 = vld [vmem:[#allocation5 + $0x18] sm:$0xff]
    %v65 = vld [vmem:[#allocation5 + $0x20] sm:$0xff]
    %v66 = vld [vmem:[#allocation5 + $0x28] sm:$0xff]
    %v67 = vld [vmem:[#allocation5 + $0x30] sm:$0xff]
    %v68 = vld [vmem:[#allocation5 + $0x38] sm:$0xff]
    %v69 = vld [vmem:[#allocation7] sm:$0xff]
    %v70 = vld [vmem:[#allocation7 + $0x8] sm:$0xff]
    %vm71 = vcmask 261120
    %v73 = vsel %vm71, %v59, 0
    %v76 = vsel %vm71, %v60, 0
    %78 = vmatprep.subr.mxu0 %v62
    %79 = vmatpush1.msra.mxu0 %v61
    %80 = vmatprep.subr.mxu0 %v64
    %81 = vmatpush1.msra.mxu0 %v63
    %82 = vmatprep.subr.mxu0 %v66
    %83 = vmatpush1.msra.mxu0 %v65
    %84 = vmatprep.subr.mxu0 %v68
    %85 = vmatpush1.msra.mxu0 %v67
    %86 = vmatprep.subr.mxu0 0.0
    %87 = vmatpush1.msra.mxu0 0.0
    %88 = vmatprep.subr.mxu0 0.0
    %89 = vmatpush1.msra.mxu0 0.0
    %90 = vmatprep.subr.mxu0 0.0
    %91 = vmatpush1.msra.mxu0 0.0
    %92 = vmatprep.subr.mxu0 0.0
    %93 = vmatpush1.msra.mxu0 0.0
    %94 = vmatprep.subr.mxu0 0.0
    %95 = vmatpush1.msra.mxu0 0.0
    %96 = vmatprep.subr.mxu0 0.0
    %97 = vmatpush1.msra.mxu0 0.0
    %98 = vmatprep.subr.mxu0 0.0
    %99 = vmatpush1.msra.mxu0 0.0
    %100 = vmatprep.subr.mxu0 0.0
    %101 = vmatpush1.msra.mxu0 0.0
    %102 = vmatprep.subr.mxu0 0.0
    %103 = vmatpush1.msra.mxu0 0.0
    %104 = vmatprep.subr.mxu0 0.0
    %105 = vmatpush1.msra.mxu0 0.0
    %106 = vmatprep.subr.mxu0 0.0
    %107 = vmatpush1.msra.mxu0 0.0
    %108 = vmatprep.subr.mxu0 0.0
    %109 = vmatpush1.msra.mxu0 0.0
    %110 = vmatprep.subr.mxu0 0.0
    %111 = vmatpush1.msra.mxu0 0.0
    %112 = vmatprep.subr.mxu0 0.0
    %113 = vmatpush1.msra.mxu0 0.0
    %114 = vmatprep.subr.mxu0 0.0
    %115 = vmatpush1.msra.mxu0 0.0
    %116 = vmatprep.subr.mxu0 0.0
    %117 = vmatpush1.msra.mxu0 0.0
    %118 = vmatprep.subr.mxu0 0.0
    %119 = vmatpush1.msra.mxu0 0.0
    %120 = vmatprep.subr.mxu0 0.0
    %121 = vmatpush1.msra.mxu0 0.0
    %122 = vmatprep.subr.mxu0 0.0
    %123 = vmatpush1.msra.mxu0 0.0
    %124 = vmatprep.subr.mxu0 0.0
    %125 = vmatpush1.msra.mxu0 0.0
    %126 = vmatprep.subr.mxu0 0.0
    %127 = vmatpush1.msra.mxu0 0.0
    %128 = vmatprep.subr.mxu0 0.0
    %129 = vmatpush1.msra.mxu0 0.0
    %130 = vmatprep.subr.mxu0 0.0
    %131 = vmatpush1.msra.mxu0 0.0
    %132 = vmatprep.subr.mxu0 0.0
    %133 = vmatpush1.msra.mxu0 0.0
    %134 = vmatprep.subr.mxu0 0.0
    %135 = vmatpush1.msra.mxu0 0.0
    %136 = vmatprep.subr.mxu0 0.0
    %137 = vmatpush1.msra.mxu0 0.0
    %138 = vmatprep.subr.mxu0 0.0
    %139 = vmatpush1.msra.mxu0 0.0
    %140 = vmatprep.subr.mxu0 0.0
    %141 = vmatpush1.msra.mxu0 0.0
    %142 = vmatprep.mubr.f32.mxu0 0.0
    %143 = vmatmul.mubr.f32.gmra.mrb[0].mxu0 %v73
    %v144 = vpop.f32.mrb[0].mxu0
    %v145 = vadd.f32 0.0, %v144
    %v146 = vpop.f32.mrb[0].mxu0
    %v147 = vadd.f32 0.0, %v146
    %148 = vmatprep.mubr.f32.mxu0 0.0
    %149 = vmatmul.mubr.f32.gmra.mrb[0].mxu0 %v76
    %v150 = vpop.f32.mrb[0].mxu0
    %v151 = vadd.f32 0.0, %v150
    %v152 = vpop.f32.mrb[0].mxu0
    %v153 = vadd.f32 0.0, %v152
    %154 = vdwg.mxu0
    %157 = vrot.lane.b32.xlu0 %v147, 96
    %v158 = vpop.permute.xlu0 %157
    %159 = vrot.lane.b32.xlu0 %v153, 96
    %v160 = vpop.permute.xlu0 %159
    %vm161 = vcmask 64512
    %v162 = vsel %vm161, %v147, 0
    %v164 = vsel %vm161, %v153, 0
    %v166 = vsel %vm161, %v158, 0
    %v168 = vsel %vm161, %v160, 0
    %170 = vmatprep.subr.mxu0 0.0
    %171 = vmatpush1.xpose.msra.mxu0 %v166
    %172 = vmatprep.subr.mxu0 0.0
    %173 = vmatpush1.xpose.msra.mxu0 %v168
    %174 = vmatprep.subr.mxu0 0.0
    %175 = vmatpush1.xpose.msra.mxu0 0.0
    %176 = vmatprep.subr.mxu0 0.0
    %177 = vmatpush1.xpose.msra.mxu0 0.0
    %178 = vmatprep.subr.mxu0 0.0
    %179 = vmatpush1.xpose.msra.mxu0 0.0
    %180 = vmatprep.subr.mxu0 0.0
    %181 = vmatpush1.xpose.msra.mxu0 0.0
    %182 = vmatprep.subr.mxu0 0.0
    %183 = vmatpush1.xpose.msra.mxu0 0.0
    %184 = vmatprep.subr.mxu0 0.0
    %185 = vmatpush1.xpose.msra.mxu0 0.0
    %186 = vmatprep.subr.mxu0 0.0
    %187 = vmatpush1.xpose.msra.mxu0 0.0
    %188 = vmatprep.subr.mxu0 0.0
    %189 = vmatpush1.xpose.msra.mxu0 0.0
    %190 = vmatprep.subr.mxu0 0.0
    %191 = vmatpush1.xpose.msra.mxu0 0.0
    %192 = vmatprep.subr.mxu0 0.0
    %193 = vmatpush1.xpose.msra.mxu0 0.0
    %194 = vmatprep.subr.mxu0 0.0
    %195 = vmatpush1.xpose.msra.mxu0 0.0
    %196 = vmatprep.subr.mxu0 0.0
    %197 = vmatpush1.xpose.msra.mxu0 0.0
    %198 = vmatprep.subr.mxu0 0.0
    %199 = vmatpush1.xpose.msra.mxu0 0.0
    %200 = vmatprep.subr.mxu0 0.0
    %201 = vmatpush1.xpose.msra.mxu0 0.0
    %202 = vmatprep.subr.mxu0 0.0
    %203 = vmatpush1.xpose.msra.mxu0 0.0
    %204 = vmatprep.subr.mxu0 0.0
    %205 = vmatpush1.xpose.msra.mxu0 0.0
    %206 = vmatprep.subr.mxu0 0.0
    %207 = vmatpush1.xpose.msra.mxu0 0.0
    %208 = vmatprep.subr.mxu0 0.0
    %209 = vmatpush1.xpose.msra.mxu0 0.0
    %210 = vmatprep.subr.mxu0 0.0
    %211 = vmatpush1.xpose.msra.mxu0 0.0
    %212 = vmatprep.subr.mxu0 0.0
    %213 = vmatpush1.xpose.msra.mxu0 0.0
    %214 = vmatprep.subr.mxu0 0.0
    %215 = vmatpush1.xpose.msra.mxu0 0.0
    %216 = vmatprep.subr.mxu0 0.0
    %217 = vmatpush1.xpose.msra.mxu0 0.0
    %218 = vmatprep.subr.mxu0 0.0
    %219 = vmatpush1.xpose.msra.mxu0 0.0
    %220 = vmatprep.subr.mxu0 0.0
    %221 = vmatpush1.xpose.msra.mxu0 0.0
    %222 = vmatprep.subr.mxu0 0.0
    %223 = vmatpush1.xpose.msra.mxu0 0.0
    %224 = vmatprep.subr.mxu0 0.0
    %225 = vmatpush1.xpose.msra.mxu0 0.0
    %226 = vmatprep.subr.mxu0 0.0
    %227 = vmatpush1.xpose.msra.mxu0 0.0
    %228 = vmatprep.subr.mxu0 0.0
    %229 = vmatpush1.xpose.msra.mxu0 0.0
    %230 = vmatprep.subr.mxu0 0.0
    %231 = vmatpush1.xpose.msra.mxu0 0.0
    %232 = vmatprep.subr.mxu0 0.0
    %233 = vmatpush1.xpose.msra.mxu0 0.0
    %234 = vmatprep.mubr.f32.mxu0 0.0
    %235 = vmatmul.mubr.f32.gmra.mrb[0].mxu0 %v162
    %v236 = vpop.f32.mrb[0].mxu0
    %v237 = vadd.f32 %v69, %v236
    %v238 = vpop.f32.mrb[0].mxu0
    %239 = vmatprep.mubr.f32.mxu0 0.0
    %240 = vmatmul.mubr.f32.gmra.mrb[0].mxu0 %v164
    %v241 = vpop.f32.mrb[0].mxu0
    %v242 = vadd.f32 %v70, %v241
    %v243 = vpop.f32.mrb[0].mxu0
    %244 = vdwg.mxu0
    %vm245 = vcmask 130048
    %v246 = vsel %vm245, %v237, -inf
    %247 = vmax.xlane.f32.xlu0 %v246
    %v248 = vpop.xlane.xlu0 %247
    %v249 = vsel %vm245, %v242, -inf
    %250 = vmax.xlane.f32.xlu0 %v249
    %v251 = vpop.xlane.xlu0 %250
    %v252 = vsub.f32 %v237, %v248
    %v253 = vsub.f32 %v242, %v251
    %v254 = vmul.f32 %v252, 1.442695
    %v255 = vpow.pop %v254
    %v256 = vmul.f32 %v253, 1.442695
    %v257 = vpow.pop %v256
    %v258 = vsel %vm245, %v255, 0.0
    %259 = vadd.xlane.f32.xlu0 %v258
    %v260 = vpop.xlane.xlu0 %259
    %v261 = vsel %vm245, %v257, 0.0
    %262 = vadd.xlane.f32.xlu0 %v261
    %v263 = vpop.xlane.xlu0 %262
    %v264 = vrcp.pop %v260
    %v265 = vmul.f32 %v255, %v264
    %v266 = vrcp.pop %v263
    %v267 = vmul.f32 %v257, %v266
    %268 = vrot.lane.b32.xlu0 %v147, 120
    %v269 = vpop.permute.xlu0 %268
    %270 = vrot.lane.b32.xlu0 %v153, 120
    %v271 = vpop.permute.xlu0 %270
    %272 = vrot.lane.b32.xlu0 %v147, 88
    %v273 = vpop.permute.xlu0 %272
    %274 = vrot.lane.b32.xlu0 %v153, 88
    %v275 = vpop.permute.xlu0 %274
    %v276 = vsel %vm161, %v269, 0
    %v278 = vsel %vm161, %v271, 0
    %v280 = vsel %vm161, %v273, 0
    %v282 = vsel %vm161, %v275, 0
    %284 = vmatprep.subr.mxu0 0.0
    %285 = vmatpush1.xpose.msra.mxu0 %v280
    %286 = vmatprep.subr.mxu0 0.0
    %287 = vmatpush1.xpose.msra.mxu0 %v282
    %288 = vmatprep.subr.mxu0 0.0
    %289 = vmatpush1.xpose.msra.mxu0 0.0
    %290 = vmatprep.subr.mxu0 0.0
    %291 = vmatpush1.xpose.msra.mxu0 0.0
    %292 = vmatprep.subr.mxu0 0.0
    %293 = vmatpush1.xpose.msra.mxu0 0.0
    %294 = vmatprep.subr.mxu0 0.0
    %295 = vmatpush1.xpose.msra.mxu0 0.0
    %296 = vmatprep.subr.mxu0 0.0
    %297 = vmatpush1.xpose.msra.mxu0 0.0
    %298 = vmatprep.subr.mxu0 0.0
    %299 = vmatpush1.xpose.msra.mxu0 0.0
    %300 = vmatprep.subr.mxu0 0.0
    %301 = vmatpush1.xpose.msra.mxu0 0.0
    %302 = vmatprep.subr.mxu0 0.0
    %303 = vmatpush1.xpose.msra.mxu0 0.0
    %304 = vmatprep.subr.mxu0 0.0
    %305 = vmatpush1.xpose.msra.mxu0 0.0
    %306 = vmatprep.subr.mxu0 0.0
    %307 = vmatpush1.xpose.msra.mxu0 0.0
    %308 = vmatprep.subr.mxu0 0.0
    %309 = vmatpush1.xpose.msra.mxu0 0.0
    %310 = vmatprep.subr.mxu0 0.0
    %311 = vmatpush1.xpose.msra.mxu0 0.0
    %312 = vmatprep.subr.mxu0 0.0
    %313 = vmatpush1.xpose.msra.mxu0 0.0
    %314 = vmatprep.subr.mxu0 0.0
    %315 = vmatpush1.xpose.msra.mxu0 0.0
    %316 = vmatprep.subr.mxu0 0.0
    %317 = vmatpush1.xpose.msra.mxu0 0.0
    %318 = vmatprep.subr.mxu0 0.0
    %319 = vmatpush1.xpose.msra.mxu0 0.0
    %320 = vmatprep.subr.mxu0 0.0
    %321 = vmatpush1.xpose.msra.mxu0 0.0
    %322 = vmatprep.subr.mxu0 0.0
    %323 = vmatpush1.xpose.msra.mxu0 0.0
    %324 = vmatprep.subr.mxu0 0.0
    %325 = vmatpush1.xpose.msra.mxu0 0.0
    %326 = vmatprep.subr.mxu0 0.0
    %327 = vmatpush1.xpose.msra.mxu0 0.0
    %328 = vmatprep.subr.mxu0 0.0
    %329 = vmatpush1.xpose.msra.mxu0 0.0
    %330 = vmatprep.subr.mxu0 0.0
    %331 = vmatpush1.xpose.msra.mxu0 0.0
    %332 = vmatprep.subr.mxu0 0.0
    %333 = vmatpush1.xpose.msra.mxu0 0.0
    %334 = vmatprep.subr.mxu0 0.0
    %335 = vmatpush1.xpose.msra.mxu0 0.0
    %336 = vmatprep.subr.mxu0 0.0
    %337 = vmatpush1.xpose.msra.mxu0 0.0
    %338 = vmatprep.subr.mxu0 0.0
    %339 = vmatpush1.xpose.msra.mxu0 0.0
    %340 = vmatprep.subr.mxu0 0.0
    %341 = vmatpush1.xpose.msra.mxu0 0.0
    %342 = vmatprep.subr.mxu0 0.0
    %343 = vmatpush1.xpose.msra.mxu0 0.0
    %344 = vmatprep.subr.mxu0 0.0
    %345 = vmatpush1.xpose.msra.mxu0 0.0
    %346 = vmatprep.subr.mxu0 0.0
    %347 = vmatpush1.xpose.msra.mxu0 0.0
    %348 = vmatprep.mubr.f32.mxu0 0.0
    %349 = vmatmul.mubr.f32.gmra.mrb[0].mxu0 %v276
    %v350 = vpop.f32.mrb[0].mxu0
    %v351 = vadd.f32 %v69, %v350
    %v352 = vpop.f32.mrb[0].mxu0
    %353 = vmatprep.mubr.f32.mxu0 0.0
    %354 = vmatmul.mubr.f32.gmra.mrb[0].mxu0 %v278
    %v355 = vpop.f32.mrb[0].mxu0
    %v356 = vadd.f32 %v70, %v355
    %v357 = vpop.f32.mrb[0].mxu0
    %358 = vdwg.mxu0
    %v359 = vsel %vm245, %v351, -inf
    %360 = vmax.xlane.f32.xlu0 %v359
    %v361 = vpop.xlane.xlu0 %360
    %v362 = vsel %vm245, %v356, -inf
    %363 = vmax.xlane.f32.xlu0 %v362
    %v364 = vpop.xlane.xlu0 %363
    %v365 = vsub.f32 %v351, %v361
    %v366 = vsub.f32 %v356, %v364
    %v367 = vmul.f32 %v365, 1.442695
    %v368 = vpow.pop %v367
    %v369 = vmul.f32 %v366, 1.442695
    %v370 = vpow.pop %v369
    %v371 = vsel %vm245, %v368, 0.0
    %372 = vadd.xlane.f32.xlu0 %v371
    %v373 = vpop.xlane.xlu0 %372
    %v374 = vsel %vm245, %v370, 0.0
    %375 = vadd.xlane.f32.xlu0 %v374
    %v376 = vpop.xlane.xlu0 %375
    %v377 = vrcp.pop %v373
    %v378 = vmul.f32 %v368, %v377
    %v379 = vrcp.pop %v376
    %v380 = vmul.f32 %v370, %v379
    %383 = vrot.lane.b32.xlu0 %v145, 96
    %v384 = vpop.permute.xlu0 %383
    %385 = vrot.lane.b32.xlu0 %v151, 96
    %v386 = vpop.permute.xlu0 %385
    %v390 = vsel %vm245, %v378, 0
    %v393 = vsel %vm245, %v380, 0
    %395 = vmatprep.subr.mxu0 0.0
    %396 = vmatpush1.msra.mxu0 %v384
    %397 = vmatprep.subr.mxu0 0.0
    %398 = vmatpush1.msra.mxu0 %v386
    %399 = vmatprep.subr.mxu0 0.0
    %400 = vmatpush1.msra.mxu0 0.0
    %401 = vmatprep.subr.mxu0 0.0
    %402 = vmatpush1.msra.mxu0 0.0
    %403 = vmatprep.subr.mxu0 0.0
    %404 = vmatpush1.msra.mxu0 0.0
    %405 = vmatprep.subr.mxu0 0.0
    %406 = vmatpush1.msra.mxu0 0.0
    %407 = vmatprep.subr.mxu0 0.0
    %408 = vmatpush1.msra.mxu0 0.0
    %409 = vmatprep.subr.mxu0 0.0
    %410 = vmatpush1.msra.mxu0 0.0
    %411 = vmatprep.subr.mxu0 0.0
    %412 = vmatpush1.msra.mxu0 0.0
    %413 = vmatprep.subr.mxu0 0.0
    %414 = vmatpush1.msra.mxu0 0.0
    %415 = vmatprep.subr.mxu0 0.0
    %416 = vmatpush1.msra.mxu0 0.0
    %417 = vmatprep.subr.mxu0 0.0
    %418 = vmatpush1.msra.mxu0 0.0
    %419 = vmatprep.subr.mxu0 0.0
    %420 = vmatpush1.msra.mxu0 0.0
    %421 = vmatprep.subr.mxu0 0.0
    %422 = vmatpush1.msra.mxu0 0.0
    %423 = vmatprep.subr.mxu0 0.0
    %424 = vmatpush1.msra.mxu0 0.0
    %425 = vmatprep.subr.mxu0 0.0
    %426 = vmatpush1.msra.mxu0 0.0
    %427 = vmatprep.subr.mxu0 0.0
    %428 = vmatpush1.msra.mxu0 0.0
    %429 = vmatprep.subr.mxu0 0.0
    %430 = vmatpush1.msra.mxu0 0.0
    %431 = vmatprep.subr.mxu0 0.0
    %432 = vmatpush1.msra.mxu0 0.0
    %433 = vmatprep.subr.mxu0 0.0
    %434 = vmatpush1.msra.mxu0 0.0
    %435 = vmatprep.subr.mxu0 0.0
    %436 = vmatpush1.msra.mxu0 0.0
    %437 = vmatprep.subr.mxu0 0.0
    %438 = vmatpush1.msra.mxu0 0.0
    %439 = vmatprep.subr.mxu0 0.0
    %440 = vmatpush1.msra.mxu0 0.0
    %441 = vmatprep.subr.mxu0 0.0
    %442 = vmatpush1.msra.mxu0 0.0
    %443 = vmatprep.subr.mxu0 0.0
    %444 = vmatpush1.msra.mxu0 0.0
    %445 = vmatprep.subr.mxu0 0.0
    %446 = vmatpush1.msra.mxu0 0.0
    %447 = vmatprep.subr.mxu0 0.0
    %448 = vmatpush1.msra.mxu0 0.0
    %449 = vmatprep.subr.mxu0 0.0
    %450 = vmatpush1.msra.mxu0 0.0
    %451 = vmatprep.subr.mxu0 0.0
    %452 = vmatpush1.msra.mxu0 0.0
    %453 = vmatprep.subr.mxu0 0.0
    %454 = vmatpush1.msra.mxu0 0.0
    %455 = vmatprep.subr.mxu0 0.0
    %456 = vmatpush1.msra.mxu0 0.0
    %457 = vmatprep.subr.mxu0 0.0
    %458 = vmatpush1.msra.mxu0 0.0
    %459 = vmatprep.mubr.f32.mxu0 0.0
    %460 = vmatmul.mubr.f32.gmra.mrb[0].mxu0 %v390
    %v461 = vpop.f32.mrb[0].mxu0
    %v462 = vadd.f32 0.0, %v461
    %v463 = vpop.f32.mrb[0].mxu0
    %464 = vmatprep.mubr.f32.mxu0 0.0
    %465 = vmatmul.mubr.f32.gmra.mrb[0].mxu0 %v393
    %v466 = vpop.f32.mrb[0].mxu0
    %v467 = vadd.f32 0.0, %v466
    %v468 = vpop.f32.mrb[0].mxu0
    %469 = vdwg.mxu0
    %v471 = vsel %vm245, %v265, 0
    %v474 = vsel %vm245, %v267, 0
    %476 = vmatprep.subr.mxu0 0.0
    %477 = vmatpush1.msra.mxu0 %v145
    %478 = vmatprep.subr.mxu0 0.0
    %479 = vmatpush1.msra.mxu0 %v151
    %480 = vmatprep.subr.mxu0 0.0
    %481 = vmatpush1.msra.mxu0 0.0
    %482 = vmatprep.subr.mxu0 0.0
    %483 = vmatpush1.msra.mxu0 0.0
    %484 = vmatprep.subr.mxu0 0.0
    %485 = vmatpush1.msra.mxu0 0.0
    %486 = vmatprep.subr.mxu0 0.0
    %487 = vmatpush1.msra.mxu0 0.0
    %488 = vmatprep.subr.mxu0 0.0
    %489 = vmatpush1.msra.mxu0 0.0
    %490 = vmatprep.subr.mxu0 0.0
    %491 = vmatpush1.msra.mxu0 0.0
    %492 = vmatprep.subr.mxu0 0.0
    %493 = vmatpush1.msra.mxu0 0.0
    %494 = vmatprep.subr.mxu0 0.0
    %495 = vmatpush1.msra.mxu0 0.0
    %496 = vmatprep.subr.mxu0 0.0
    %497 = vmatpush1.msra.mxu0 0.0
    %498 = vmatprep.subr.mxu0 0.0
    %499 = vmatpush1.msra.mxu0 0.0
    %500 = vmatprep.subr.mxu0 0.0
    %501 = vmatpush1.msra.mxu0 0.0
    %502 = vmatprep.subr.mxu0 0.0
    %503 = vmatpush1.msra.mxu0 0.0
    %504 = vmatprep.subr.mxu0 0.0
    %505 = vmatpush1.msra.mxu0 0.0
    %506 = vmatprep.subr.mxu0 0.0
    %507 = vmatpush1.msra.mxu0 0.0
    %508 = vmatprep.subr.mxu0 0.0
    %509 = vmatpush1.msra.mxu0 0.0
    %510 = vmatprep.subr.mxu0 0.0
    %511 = vmatpush1.msra.mxu0 0.0
    %512 = vmatprep.subr.mxu0 0.0
    %513 = vmatpush1.msra.mxu0 0.0
    %514 = vmatprep.subr.mxu0 0.0
    %515 = vmatpush1.msra.mxu0 0.0
    %516 = vmatprep.subr.mxu0 0.0
    %517 = vmatpush1.msra.mxu0 0.0
    %518 = vmatprep.subr.mxu0 0.0
    %519 = vmatpush1.msra.mxu0 0.0
    %520 = vmatprep.subr.mxu0 0.0
    %521 = vmatpush1.msra.mxu0 0.0
    %522 = vmatprep.subr.mxu0 0.0
    %523 = vmatpush1.msra.mxu0 0.0
    %524 = vmatprep.subr.mxu0 0.0
    %525 = vmatpush1.msra.mxu0 0.0
    %526 = vmatprep.subr.mxu0 0.0
    %527 = vmatpush1.msra.mxu0 0.0
    %528 = vmatprep.subr.mxu0 0.0
    %529 = vmatpush1.msra.mxu0 0.0
    %530 = vmatprep.subr.mxu0 0.0
    %531 = vmatpush1.msra.mxu0 0.0
    %532 = vmatprep.subr.mxu0 0.0
    %533 = vmatpush1.msra.mxu0 0.0
    %534 = vmatprep.subr.mxu0 0.0
    %535 = vmatpush1.msra.mxu0 0.0
    %536 = vmatprep.subr.mxu0 0.0
    %537 = vmatpush1.msra.mxu0 0.0
    %538 = vmatprep.subr.mxu0 0.0
    %539 = vmatpush1.msra.mxu0 0.0
    %540 = vmatprep.mubr.f32.mxu0 0.0
    %541 = vmatmul.mubr.f32.gmra.mrb[0].mxu0 %v471
    %v542 = vpop.f32.mrb[0].mxu0
    %v543 = vadd.f32 %v462, %v542
    %v544 = vpop.f32.mrb[0].mxu0
    %545 = vmatprep.mubr.f32.mxu0 0.0
    %546 = vmatmul.mubr.f32.gmra.mrb[0].mxu0 %v474
    %v547 = vpop.f32.mrb[0].mxu0
    %v548 = vadd.f32 %v467, %v547
    %v549 = vpop.f32.mrb[0].mxu0
    %550 = vdwg.mxu0
    %551 = vrot.lane.b32.xlu0 %v147, 112
    %v552 = vpop.permute.xlu0 %551
    %553 = vrot.lane.b32.xlu0 %v153, 112
    %v554 = vpop.permute.xlu0 %553
    %555 = vrot.lane.b32.xlu0 %v147, 80
    %v556 = vpop.permute.xlu0 %555
    %557 = vrot.lane.b32.xlu0 %v153, 80
    %v558 = vpop.permute.xlu0 %557
    %v559 = vsel %vm161, %v552, 0
    %v561 = vsel %vm161, %v554, 0
    %v563 = vsel %vm161, %v556, 0
    %v565 = vsel %vm161, %v558, 0
    %567 = vmatprep.subr.mxu0 0.0
    %568 = vmatpush1.xpose.msra.mxu0 %v563
    %569 = vmatprep.subr.mxu0 0.0
    %570 = vmatpush1.xpose.msra.mxu0 %v565
    %571 = vmatprep.subr.mxu0 0.0
    %572 = vmatpush1.xpose.msra.mxu0 0.0
    %573 = vmatprep.subr.mxu0 0.0
    %574 = vmatpush1.xpose.msra.mxu0 0.0
    %575 = vmatprep.subr.mxu0 0.0
    %576 = vmatpush1.xpose.msra.mxu0 0.0
    %577 = vmatprep.subr.mxu0 0.0
    %578 = vmatpush1.xpose.msra.mxu0 0.0
    %579 = vmatprep.subr.mxu0 0.0
    %580 = vmatpush1.xpose.msra.mxu0 0.0
    %581 = vmatprep.subr.mxu0 0.0
    %582 = vmatpush1.xpose.msra.mxu0 0.0
    %583 = vmatprep.subr.mxu0 0.0
    %584 = vmatpush1.xpose.msra.mxu0 0.0
    %585 = vmatprep.subr.mxu0 0.0
    %586 = vmatpush1.xpose.msra.mxu0 0.0
    %587 = vmatprep.subr.mxu0 0.0
    %588 = vmatpush1.xpose.msra.mxu0 0.0
    %589 = vmatprep.subr.mxu0 0.0
    %590 = vmatpush1.xpose.msra.mxu0 0.0
    %591 = vmatprep.subr.mxu0 0.0
    %592 = vmatpush1.xpose.msra.mxu0 0.0
    %593 = vmatprep.subr.mxu0 0.0
    %594 = vmatpush1.xpose.msra.mxu0 0.0
    %595 = vmatprep.subr.mxu0 0.0
    %596 = vmatpush1.xpose.msra.mxu0 0.0
    %597 = vmatprep.subr.mxu0 0.0
    %598 = vmatpush1.xpose.msra.mxu0 0.0
    %599 = vmatprep.subr.mxu0 0.0
    %600 = vmatpush1.xpose.msra.mxu0 0.0
    %601 = vmatprep.subr.mxu0 0.0
    %602 = vmatpush1.xpose.msra.mxu0 0.0
    %603 = vmatprep.subr.mxu0 0.0
    %604 = vmatpush1.xpose.msra.mxu0 0.0
    %605 = vmatprep.subr.mxu0 0.0
    %606 = vmatpush1.xpose.msra.mxu0 0.0
    %607 = vmatprep.subr.mxu0 0.0
    %608 = vmatpush1.xpose.msra.mxu0 0.0
    %609 = vmatprep.subr.mxu0 0.0
    %610 = vmatpush1.xpose.msra.mxu0 0.0
    %611 = vmatprep.subr.mxu0 0.0
    %612 = vmatpush1.xpose.msra.mxu0 0.0
    %613 = vmatprep.subr.mxu0 0.0
    %614 = vmatpush1.xpose.msra.mxu0 0.0
    %615 = vmatprep.subr.mxu0 0.0
    %616 = vmatpush1.xpose.msra.mxu0 0.0
    %617 = vmatprep.subr.mxu0 0.0
    %618 = vmatpush1.xpose.msra.mxu0 0.0
    %619 = vmatprep.subr.mxu0 0.0
    %620 = vmatpush1.xpose.msra.mxu0 0.0
    %621 = vmatprep.subr.mxu0 0.0
    %622 = vmatpush1.xpose.msra.mxu0 0.0
    %623 = vmatprep.subr.mxu0 0.0
    %624 = vmatpush1.xpose.msra.mxu0 0.0
    %625 = vmatprep.subr.mxu0 0.0
    %626 = vmatpush1.xpose.msra.mxu0 0.0
    %627 = vmatprep.subr.mxu0 0.0
    %628 = vmatpush1.xpose.msra.mxu0 0.0
    %629 = vmatprep.subr.mxu0 0.0
    %630 = vmatpush1.xpose.msra.mxu0 0.0
    %631 = vmatprep.mubr.f32.mxu0 0.0
    %632 = vmatmul.mubr.f32.gmra.mrb[0].mxu0 %v559
    %v633 = vpop.f32.mrb[0].mxu0
    %v634 = vadd.f32 %v69, %v633
    %v635 = vpop.f32.mrb[0].mxu0
    %636 = vmatprep.mubr.f32.mxu0 0.0
    %637 = vmatmul.mubr.f32.gmra.mrb[0].mxu0 %v561
    %v638 = vpop.f32.mrb[0].mxu0
    %v639 = vadd.f32 %v70, %v638
    %v640 = vpop.f32.mrb[0].mxu0
    %641 = vdwg.mxu0
    %v642 = vsel %vm245, %v634, -inf
    %643 = vmax.xlane.f32.xlu0 %v642
    %v644 = vpop.xlane.xlu0 %643
    %v645 = vsel %vm245, %v639, -inf
    %646 = vmax.xlane.f32.xlu0 %v645
    %v647 = vpop.xlane.xlu0 %646
    %v648 = vsub.f32 %v634, %v644
    %v649 = vsub.f32 %v639, %v647
    %v650 = vmul.f32 %v648, 1.442695
    %v651 = vpow.pop %v650
    %v652 = vmul.f32 %v649, 1.442695
    %v653 = vpow.pop %v652
    %v654 = vsel %vm245, %v651, 0.0
    %655 = vadd.xlane.f32.xlu0 %v654
    %v656 = vpop.xlane.xlu0 %655
    %v657 = vsel %vm245, %v653, 0.0
    %658 = vadd.xlane.f32.xlu0 %v657
    %v659 = vpop.xlane.xlu0 %658
    %v660 = vrcp.pop %v656
    %v661 = vmul.f32 %v651, %v660
    %v662 = vrcp.pop %v659
    %v663 = vmul.f32 %v653, %v662
    %664 = vrot.lane.b32.xlu0 %v145, 64
    %v665 = vpop.permute.xlu0 %664
    %666 = vrot.lane.b32.xlu0 %v151, 64
    %v667 = vpop.permute.xlu0 %666
    %v671 = vsel %vm245, %v661, 0
    %v674 = vsel %vm245, %v663, 0
    %676 = vmatprep.subr.mxu0 0.0
    %677 = vmatpush1.msra.mxu0 %v665
    %678 = vmatprep.subr.mxu0 0.0
    %679 = vmatpush1.msra.mxu0 %v667
    %680 = vmatprep.subr.mxu0 0.0
    %681 = vmatpush1.msra.mxu0 0.0
    %682 = vmatprep.subr.mxu0 0.0
    %683 = vmatpush1.msra.mxu0 0.0
    %684 = vmatprep.subr.mxu0 0.0
    %685 = vmatpush1.msra.mxu0 0.0
    %686 = vmatprep.subr.mxu0 0.0
    %687 = vmatpush1.msra.mxu0 0.0
    %688 = vmatprep.subr.mxu0 0.0
    %689 = vmatpush1.msra.mxu0 0.0
    %690 = vmatprep.subr.mxu0 0.0
    %691 = vmatpush1.msra.mxu0 0.0
    %692 = vmatprep.subr.mxu0 0.0
    %693 = vmatpush1.msra.mxu0 0.0
    %694 = vmatprep.subr.mxu0 0.0
    %695 = vmatpush1.msra.mxu0 0.0
    %696 = vmatprep.subr.mxu0 0.0
    %697 = vmatpush1.msra.mxu0 0.0
    %698 = vmatprep.subr.mxu0 0.0
    %699 = vmatpush1.msra.mxu0 0.0
    %700 = vmatprep.subr.mxu0 0.0
    %701 = vmatpush1.msra.mxu0 0.0
    %702 = vmatprep.subr.mxu0 0.0
    %703 = vmatpush1.msra.mxu0 0.0
    %704 = vmatprep.subr.mxu0 0.0
    %705 = vmatpush1.msra.mxu0 0.0
    %706 = vmatprep.subr.mxu0 0.0
    %707 = vmatpush1.msra.mxu0 0.0
    %708 = vmatprep.subr.mxu0 0.0
    %709 = vmatpush1.msra.mxu0 0.0
    %710 = vmatprep.subr.mxu0 0.0
    %711 = vmatpush1.msra.mxu0 0.0
    %712 = vmatprep.subr.mxu0 0.0
    %713 = vmatpush1.msra.mxu0 0.0
    %714 = vmatprep.subr.mxu0 0.0
    %715 = vmatpush1.msra.mxu0 0.0
    %716 = vmatprep.subr.mxu0 0.0
    %717 = vmatpush1.msra.mxu0 0.0
    %718 = vmatprep.subr.mxu0 0.0
    %719 = vmatpush1.msra.mxu0 0.0
    %720 = vmatprep.subr.mxu0 0.0
    %721 = vmatpush1.msra.mxu0 0.0
    %722 = vmatprep.subr.mxu0 0.0
    %723 = vmatpush1.msra.mxu0 0.0
    %724 = vmatprep.subr.mxu0 0.0
    %725 = vmatpush1.msra.mxu0 0.0
    %726 = vmatprep.subr.mxu0 0.0
    %727 = vmatpush1.msra.mxu0 0.0
    %728 = vmatprep.subr.mxu0 0.0
    %729 = vmatpush1.msra.mxu0 0.0
    %730 = vmatprep.subr.mxu0 0.0
    %731 = vmatpush1.msra.mxu0 0.0
    %732 = vmatprep.subr.mxu0 0.0
    %733 = vmatpush1.msra.mxu0 0.0
    %734 = vmatprep.subr.mxu0 0.0
    %735 = vmatpush1.msra.mxu0 0.0
    %736 = vmatprep.subr.mxu0 0.0
    %737 = vmatpush1.msra.mxu0 0.0
    %738 = vmatprep.subr.mxu0 0.0
    %739 = vmatpush1.msra.mxu0 0.0
    %740 = vmatprep.mubr.f32.mxu0 0.0
    %741 = vmatmul.mubr.f32.gmra.mrb[0].mxu0 %v671
    %v742 = vpop.f32.mrb[0].mxu0
    %v743 = vadd.f32 0.0, %v742
    %v744 = vpop.f32.mrb[0].mxu0
    %745 = vmatprep.mubr.f32.mxu0 0.0
    %746 = vmatmul.mubr.f32.gmra.mrb[0].mxu0 %v674
    %v747 = vpop.f32.mrb[0].mxu0
    %v748 = vadd.f32 0.0, %v747
    %v749 = vpop.f32.mrb[0].mxu0
    %750 = vdwg.mxu0
    %v751 = vadd.f32 %v543, %v743
    %v752 = vadd.f32 %v548, %v748
    %753 = vrot.lane.b32.xlu0 %v147, 104
    %v754 = vpop.permute.xlu0 %753
    %755 = vrot.lane.b32.xlu0 %v153, 104
    %v756 = vpop.permute.xlu0 %755
    %757 = vrot.lane.b32.xlu0 %v147, 72
    %v758 = vpop.permute.xlu0 %757
    %759 = vrot.lane.b32.xlu0 %v153, 72
    %v760 = vpop.permute.xlu0 %759
    %v761 = vsel %vm161, %v754, 0
    %v763 = vsel %vm161, %v756, 0
    %v765 = vsel %vm161, %v758, 0
    %v767 = vsel %vm161, %v760, 0
    %769 = vmatprep.subr.mxu0 0.0
    %770 = vmatpush1.xpose.msra.mxu0 %v765
    %771 = vmatprep.subr.mxu0 0.0
    %772 = vmatpush1.xpose.msra.mxu0 %v767
    %773 = vmatprep.subr.mxu0 0.0
    %774 = vmatpush1.xpose.msra.mxu0 0.0
    %775 = vmatprep.subr.mxu0 0.0
    %776 = vmatpush1.xpose.msra.mxu0 0.0
    %777 = vmatprep.subr.mxu0 0.0
    %778 = vmatpush1.xpose.msra.mxu0 0.0
    %779 = vmatprep.subr.mxu0 0.0
    %780 = vmatpush1.xpose.msra.mxu0 0.0
    %781 = vmatprep.subr.mxu0 0.0
    %782 = vmatpush1.xpose.msra.mxu0 0.0
    %783 = vmatprep.subr.mxu0 0.0
    %784 = vmatpush1.xpose.msra.mxu0 0.0
    %785 = vmatprep.subr.mxu0 0.0
    %786 = vmatpush1.xpose.msra.mxu0 0.0
    %787 = vmatprep.subr.mxu0 0.0
    %788 = vmatpush1.xpose.msra.mxu0 0.0
    %789 = vmatprep.subr.mxu0 0.0
    %790 = vmatpush1.xpose.msra.mxu0 0.0
    %791 = vmatprep.subr.mxu0 0.0
    %792 = vmatpush1.xpose.msra.mxu0 0.0
    %793 = vmatprep.subr.mxu0 0.0
    %794 = vmatpush1.xpose.msra.mxu0 0.0
    %795 = vmatprep.subr.mxu0 0.0
    %796 = vmatpush1.xpose.msra.mxu0 0.0
    %797 = vmatprep.subr.mxu0 0.0
    %798 = vmatpush1.xpose.msra.mxu0 0.0
    %799 = vmatprep.subr.mxu0 0.0
    %800 = vmatpush1.xpose.msra.mxu0 0.0
    %801 = vmatprep.subr.mxu0 0.0
    %802 = vmatpush1.xpose.msra.mxu0 0.0
    %803 = vmatprep.subr.mxu0 0.0
    %804 = vmatpush1.xpose.msra.mxu0 0.0
    %805 = vmatprep.subr.mxu0 0.0
    %806 = vmatpush1.xpose.msra.mxu0 0.0
    %807 = vmatprep.subr.mxu0 0.0
    %808 = vmatpush1.xpose.msra.mxu0 0.0
    %809 = vmatprep.subr.mxu0 0.0
    %810 = vmatpush1.xpose.msra.mxu0 0.0
    %811 = vmatprep.subr.mxu0 0.0
    %812 = vmatpush1.xpose.msra.mxu0 0.0
    %813 = vmatprep.subr.mxu0 0.0
    %814 = vmatpush1.xpose.msra.mxu0 0.0
    %815 = vmatprep.subr.mxu0 0.0
    %816 = vmatpush1.xpose.msra.mxu0 0.0
    %817 = vmatprep.subr.mxu0 0.0
    %818 = vmatpush1.xpose.msra.mxu0 0.0
    %819 = vmatprep.subr.mxu0 0.0
    %820 = vmatpush1.xpose.msra.mxu0 0.0
    %821 = vmatprep.subr.mxu0 0.0
    %822 = vmatpush1.xpose.msra.mxu0 0.0
    %823 = vmatprep.subr.mxu0 0.0
    %824 = vmatpush1.xpose.msra.mxu0 0.0
    %825 = vmatprep.subr.mxu0 0.0
    %826 = vmatpush1.xpose.msra.mxu0 0.0
    %827 = vmatprep.subr.mxu0 0.0
    %828 = vmatpush1.xpose.msra.mxu0 0.0
    %829 = vmatprep.subr.mxu0 0.0
    %830 = vmatpush1.xpose.msra.mxu0 0.0
    %831 = vmatprep.subr.mxu0 0.0
    %832 = vmatpush1.xpose.msra.mxu0 0.0
    %833 = vmatprep.mubr.f32.mxu0 0.0
    %834 = vmatmul.mubr.f32.gmra.mrb[0].mxu0 %v761
    %v835 = vpop.f32.mrb[0].mxu0
    %v836 = vadd.f32 %v69, %v835
    %v837 = vpop.f32.mrb[0].mxu0
    %838 = vmatprep.mubr.f32.mxu0 0.0
    %839 = vmatmul.mubr.f32.gmra.mrb[0].mxu0 %v763
    %v840 = vpop.f32.mrb[0].mxu0
    %v841 = vadd.f32 %v70, %v840
    %v842 = vpop.f32.mrb[0].mxu0
    %843 = vdwg.mxu0
    %v844 = vsel %vm245, %v836, -inf
    %845 = vmax.xlane.f32.xlu0 %v844
    %v846 = vpop.xlane.xlu0 %845
    %v847 = vsel %vm245, %v841, -inf
    %848 = vmax.xlane.f32.xlu0 %v847
    %v849 = vpop.xlane.xlu0 %848
    %v850 = vsub.f32 %v836, %v846
    %v851 = vsub.f32 %v841, %v849
    %v852 = vmul.f32 %v850, 1.442695
    %v853 = vpow.pop %v852
    %v854 = vmul.f32 %v851, 1.442695
    %v855 = vpow.pop %v854
    %v856 = vsel %vm245, %v853, 0.0
    %857 = vadd.xlane.f32.xlu0 %v856
    %v858 = vpop.xlane.xlu0 %857
    %v859 = vsel %vm245, %v855, 0.0
    %860 = vadd.xlane.f32.xlu0 %v859
    %v861 = vpop.xlane.xlu0 %860
    %v862 = vrcp.pop %v858
    %v863 = vmul.f32 %v853, %v862
    %v864 = vrcp.pop %v861
    %v865 = vmul.f32 %v855, %v864
    %866 = vrot.lane.b32.xlu0 %v145, 32
    %v867 = vpop.permute.xlu0 %866
    %868 = vrot.lane.b32.xlu0 %v151, 32
    %v869 = vpop.permute.xlu0 %868
    %v873 = vsel %vm245, %v863, 0
    %v876 = vsel %vm245, %v865, 0
    %878 = vmatprep.subr.mxu0 0.0
    %879 = vmatpush1.msra.mxu0 %v867
    %880 = vmatprep.subr.mxu0 0.0
    %881 = vmatpush1.msra.mxu0 %v869
    %882 = vmatprep.subr.mxu0 0.0
    %883 = vmatpush1.msra.mxu0 0.0
    %884 = vmatprep.subr.mxu0 0.0
    %885 = vmatpush1.msra.mxu0 0.0
    %886 = vmatprep.subr.mxu0 0.0
    %887 = vmatpush1.msra.mxu0 0.0
    %888 = vmatprep.subr.mxu0 0.0
    %889 = vmatpush1.msra.mxu0 0.0
    %890 = vmatprep.subr.mxu0 0.0
    %891 = vmatpush1.msra.mxu0 0.0
    %892 = vmatprep.subr.mxu0 0.0
    %893 = vmatpush1.msra.mxu0 0.0
    %894 = vmatprep.subr.mxu0 0.0
    %895 = vmatpush1.msra.mxu0 0.0
    %896 = vmatprep.subr.mxu0 0.0
    %897 = vmatpush1.msra.mxu0 0.0
    %898 = vmatprep.subr.mxu0 0.0
    %899 = vmatpush1.msra.mxu0 0.0
    %900 = vmatprep.subr.mxu0 0.0
    %901 = vmatpush1.msra.mxu0 0.0
    %902 = vmatprep.subr.mxu0 0.0
    %903 = vmatpush1.msra.mxu0 0.0
    %904 = vmatprep.subr.mxu0 0.0
    %905 = vmatpush1.msra.mxu0 0.0
    %906 = vmatprep.subr.mxu0 0.0
    %907 = vmatpush1.msra.mxu0 0.0
    %908 = vmatprep.subr.mxu0 0.0
    %909 = vmatpush1.msra.mxu0 0.0
    %910 = vmatprep.subr.mxu0 0.0
    %911 = vmatpush1.msra.mxu0 0.0
    %912 = vmatprep.subr.mxu0 0.0
    %913 = vmatpush1.msra.mxu0 0.0
    %914 = vmatprep.subr.mxu0 0.0
    %915 = vmatpush1.msra.mxu0 0.0
    %916 = vmatprep.subr.mxu0 0.0
    %917 = vmatpush1.msra.mxu0 0.0
    %918 = vmatprep.subr.mxu0 0.0
    %919 = vmatpush1.msra.mxu0 0.0
    %920 = vmatprep.subr.mxu0 0.0
    %921 = vmatpush1.msra.mxu0 0.0
    %922 = vmatprep.subr.mxu0 0.0
    %923 = vmatpush1.msra.mxu0 0.0
    %924 = vmatprep.subr.mxu0 0.0
    %925 = vmatpush1.msra.mxu0 0.0
    %926 = vmatprep.subr.mxu0 0.0
    %927 = vmatpush1.msra.mxu0 0.0
    %928 = vmatprep.subr.mxu0 0.0
    %929 = vmatpush1.msra.mxu0 0.0
    %930 = vmatprep.subr.mxu0 0.0
    %931 = vmatpush1.msra.mxu0 0.0
    %932 = vmatprep.subr.mxu0 0.0
    %933 = vmatpush1.msra.mxu0 0.0
    %934 = vmatprep.subr.mxu0 0.0
    %935 = vmatpush1.msra.mxu0 0.0
    %936 = vmatprep.subr.mxu0 0.0
    %937 = vmatpush1.msra.mxu0 0.0
    %938 = vmatprep.subr.mxu0 0.0
    %939 = vmatpush1.msra.mxu0 0.0
    %940 = vmatprep.subr.mxu0 0.0
    %941 = vmatpush1.msra.mxu0 0.0
    %942 = vmatprep.mubr.f32.mxu0 0.0
    %943 = vmatmul.mubr.f32.gmra.mrb[0].mxu0 %v873
    %v944 = vpop.f32.mrb[0].mxu0
    %v945 = vadd.f32 0.0, %v944
    %v946 = vpop.f32.mrb[0].mxu0
    %947 = vmatprep.mubr.f32.mxu0 0.0
    %948 = vmatmul.mubr.f32.gmra.mrb[0].mxu0 %v876
    %v949 = vpop.f32.mrb[0].mxu0
    %v950 = vadd.f32 0.0, %v949
    %v951 = vpop.f32.mrb[0].mxu0
    %952 = vdwg.mxu0
    %v953 = vadd.f32 %v751, %v945
    %v954 = vadd.f32 %v752, %v950
    %v955 = vld [vmem:[%s2] sm:$0x1]
    %v957 = vlaneseq
    %v958 = vshrl.u32 %v957, 7
    %v959 = vsub.s32 0, %v958
    %v960 = vrot.slane %v955, %v959
    %v962 = vadd.f32 %v953, %v960
    %v963 = vadd.f32 %v954, %v960
    %964 = vst.msk [vmem:[#allocation8] sm:$0xff] %vm71, %v962
    %965 = vst.msk [vmem:[#allocation8 + $0x8] sm:$0xff] %vm71, %v963
    // Predicated region
    $region30: #{tpu_custom_call.1} parent=1 // pred_check
      _
    $region31: #{tpu_custom_call.1} parent=1 // pred_check_branch
      %967 = sbr.rel (0) target = $region33
    $region32: #{tpu_custom_call.1} parent=1 // pred_region
      %s969 = ssub.s32 256, 256
      %970 = vsyncadd [#allocation4], %s969
      %s971 = sshll.u32 [#allocation8], 4
      %s972 = int_to_ptr.vmem [resolvable:$true] %s971
      %977 = dma.vmem_to_hbm [thread:$0]  %s972, 256, %s4, [#allocation4], 128, 128, 8
    $region33: #{tpu_custom_call.1} parent=1 // pred_fallthru
      _
    // Predicated region
    $region34: #{tpu_custom_call.1} parent=1 // pred_check
      _
    $region35: #{tpu_custom_call.1} parent=1 // pred_check_branch
      %979 = sbr.rel (0) target = $region37
    $region36: #{tpu_custom_call.1} parent=1 // pred_region
      %980 = dma.done [#allocation4], 256
    $region37: #{tpu_custom_call.1} parent=1 // pred_fallthru
      _
    %981 = vsyncpa [#allocation3], 1
    %982 = vsyncpa [#allocation6], 1
    %983 = vsyncpa [#allocation4], 1

</llo_original>
